<compile_context>
chip_gen: v7x
topology: tpu7x:2x2x1
jax: 0.10.0
libtpu: 0.0.40
codegen_flags: <defaults>
</compile_context>

<pallas_src>
import functools
import math

import jax
import jax.numpy as jnp
from jax.experimental import pallas as pl
from jax.experimental.pallas import tpu as pltpu

LANES = 128          # TPU vreg lane width; all feature dims are zero-padded to this
NEG_INF = -1e30
TQ_MAX = 256         # dst-row tile; multiple of 256 matches the v6e/v7x 2x256^2 MXU


def _vmem():
    return pl.BlockSpec(memory_space=pltpu.MemorySpace.VMEM)


def _pad_lanes(a, width=LANES):
    """Zero-pad the last dim of a 2-D array up to `width` (no-op if already wide)."""
    pad = width - a.shape[-1]
    if pad <= 0:
        return a
    return jnp.pad(a, ((0, 0), (0, pad)))


def _row_tile(n):
    """Dst-row tile: round tiny graphs up to the bf16 sublane pack (16), cap at TQ_MAX."""
    if n >= TQ_MAX:
        return TQ_MAX
    return -(-n // 16) * 16


# --------------------------- Pallas kernels ---------------------------------

def xw_kernel(x_ref, w_ref, h_ref):
    """h = X @ W_aug (att_dst folded as extra column); bf16 out, f32 accumulate."""
    h_ref[...] = jnp.dot(x_ref[...], w_ref[...],
                         preferred_element_type=jnp.float32).astype(jnp.bfloat16)


def gat_attn_kernel(h_ref, adj_ref, asrc_ref, bias_ref, ppool_ref, out_ref, *, fout):
    """One dst-row tile of GATConv attention + aggregation + ReLU + fused TopK score.

    h_ref     [Np, 128] bf16  full-resident X@W_aug (column `fout` holds s_dst)
    adj_ref   [TQ, Np]  bf16  adj tile: adj[i, j] = 1 iff edge j -> i (self-loops baked in)
    asrc_ref  [1, 128]  bf16  att_src (zero-padded)
    bias_ref  [1, 128]  f32   bias (zero-padded)
    ppool_ref [1, 128]  f32   TopK projection p/||p|| (zero-padded)
    out_ref   [TQ, 128] bf16  lanes [:fout) = relu(GATConv) features,
                              lanes [fout:) = broadcast tanh TopK score
    """
    tq = out_ref.shape[0]
    row0 = pl.multiple_of(pl.program_id(0) * tq, tq)

    h = h_ref[...]                                              # [Np, 128] bf16
    hd = h_ref[pl.ds(row0, tq), :]                              # dst rows of this tile
    s_dst = hd[:, fout:fout + 1].astype(jnp.float32)            # folded att_dst column [TQ,1]

    # s_src for every source node: one row-oriented bf16 dot_general (f32 accumulate).
    s_src = jax.lax.dot_general(
        asrc_ref[...], h,
        dimension_numbers=(((1,), (1,)), ((), ())),
        preferred_element_type=jnp.float32)                     # [1, Np]

    # e[i, j] = LeakyReLU(a_dst.h_i + a_src.h_j) for edge j -> i ; f32 elementwise (v5e-safe).
    e = s_dst + s_src                                           # [TQ, Np]
    e = jnp.where(e >= 0.0, e, 0.2 * e)                         # LeakyReLU(0.2)
    e = jnp.where(adj_ref[...] > 0.5, e, NEG_INF)               # single masking pass

    # Exact per-row softmax over incoming neighbours; reciprocal on the (idle) EUP.
    m = jnp.max(e, axis=-1, keepdims=True)
    p = jnp.exp(e - m)                                          # masked entries underflow to 0
    alpha = p * pl.reciprocal(jnp.sum(p, axis=-1, keepdims=True), approx=True)

    # Aggregation on the MXU with bf16 operands, f32 accumulation.
    agg = jnp.dot(alpha.astype(jnp.bfloat16), h, preferred_element_type=jnp.float32)
    out = jnp.maximum(agg + bias_ref[...], 0.0)                 # + bias, fused ReLU

    # Fused TopKPooling score, written into the padded lanes -> one lane-dense bf16 store.
    score = jnp.tanh(jnp.sum(out * ppool_ref[...], axis=-1, keepdims=True))    # [TQ,1]
    col = jax.lax.broadcasted_iota(jnp.int32, out.shape, 1)
    out_ref[...] = jnp.where(col < fout, out, score).astype(jnp.bfloat16)


def readout_kernel(pool_ref, x_ref, wfc_ref, bfc_ref, out_ref, *, ncls):
    """avg_pool(batch) + Linear + log_softmax(dim=1), fused; output lane-padded."""
    pooled = jnp.dot(pool_ref[...], x_ref[...].astype(jnp.float32),
                     preferred_element_type=jnp.float32)                        # [G,128]
    logits = jnp.dot(pooled, wfc_ref[...], preferred_element_type=jnp.float32) + bfc_ref[...]
    valid = jax.lax.broadcasted_iota(jnp.int32, logits.shape, 1) < ncls
    lm = jnp.where(valid, logits, NEG_INF)
    m = jnp.max(lm, axis=-1, keepdims=True)
    lse = m + jnp.log(jnp.sum(jnp.exp(lm - m), axis=-1, keepdims=True))
    out_ref[...] = jnp.where(valid, logits - lse, 0.0)


# --------------------------- wrappers (glue) ---------------------------------

def gat_layer(x, adj, W, att_src, att_dst, bias, p_pool):
    """GATConv(+bias, self-loops already in adj) -> ReLU -> fused TopK score.

    x   [N, 128] bf16 (lane-padded; padded lanes may hold the previous layer's score)
    adj [N, N]   bf16 (0/1 with self-loops)
    Returns (x_new [N,128] bf16 with score in padded lanes, score [N] f32).
    """
    N = x.shape[0]
    Fin, Fout = W.shape
    TQ = _row_tile(N)
    Np = -(-N // TQ) * TQ                      # pad node dim so the grid divides evenly

    xp = x if Np == N else jnp.pad(x, ((0, Np - N), (0, 0)))
    adjp = adj if Np == N else jnp.pad(adj, ((0, Np - N), (0, Np - N)))

    # Augmented weight: columns [:Fout] = W, column Fout = W @ att_dst (s_dst fold).
    Wa = jnp.zeros((LANES, LANES), jnp.float32)
    Wa = Wa.at[:Fin, :Fout].set(W).at[:Fin, Fout].set(W @ att_dst)
    Wa = Wa.astype(jnp.bfloat16)

    asrc = _pad_lanes(att_src.reshape(1, Fout)).astype(jnp.bfloat16)
    bp = _pad_lanes(bias.reshape(1, Fout).astype(jnp.float32))
    pn = p_pool / jnp.linalg.norm(p_pool)                        # TopK uses p/||p||
    pp = _pad_lanes(pn.reshape(1, Fout).astype(jnp.float32))

    grid = (Np // TQ,)

    # h = X @ W_aug once (tiny row-tiled matmul), kept full-resident for the attention kernel.
    h = pl.pallas_call(
        xw_kernel,
        out_shape=jax.ShapeDtypeStruct((Np, LANES), jnp.bfloat16),
        grid=grid,
        in_specs=[pl.BlockSpec((TQ, LANES), lambda i: (i, 0)),
                  pl.BlockSpec((LANES, LANES), lambda i: (0, 0))],
        out_specs=pl.BlockSpec((TQ, LANES), lambda i: (i, 0)),
        compiler_params=pltpu.CompilerParams(dimension_semantics=("parallel",)),
    )(xp, Wa)

    # Dst-row tiled attention: VMEM is O(TQ*Np); adj tiles stream via double-buffered DMA.
    # TODO(synk): for [TQ, N] slabs that no longer fit VMEM (N >> 64k), add a src-axis
    # grid dimension with an online-softmax accumulator ("arbitrary" on that axis).
    out = pl.pallas_call(
        functools.partial(gat_attn_kernel, fout=Fout),
        out_shape=jax.ShapeDtypeStruct((Np, LANES), jnp.bfloat16),
        grid=grid,
        in_specs=[pl.BlockSpec((Np, LANES), lambda i: (0, 0)),    # h, full-resident
                  pl.BlockSpec((TQ, Np), lambda i: (i, 0)),       # adj dst-row tile
                  pl.BlockSpec((1, LANES), lambda i: (0, 0)),     # att_src
                  pl.BlockSpec((1, LANES), lambda i: (0, 0)),     # bias
                  pl.BlockSpec((1, LANES), lambda i: (0, 0))],    # pool projection
        out_specs=pl.BlockSpec((TQ, LANES), lambda i: (i, 0)),
        compiler_params=pltpu.CompilerParams(dimension_semantics=("parallel",)),
    )(h, adjp, asrc, bp, pp)

    x_new = out[:N]
    score = out[:N, LANES - 1].astype(jnp.float32)
    return x_new, score


def topk_pool(x, score, adj, batch, graph_sizes, ratio):
    """TopKPooling selection + gating.  Scores come fused from the GAT kernel."""
    # Single combined-key argsort (graph-major, score-descending); tanh scores lie in
    # (-1, 1) so a spacing of 4 per graph id keeps graphs strictly separated.
    key = batch.astype(jnp.float32) * 4.0 - score
    order = jnp.argsort(key)
    parts, new_sizes, start = [], [], 0
    for sz in graph_sizes:                       # graph sizes are static -> static slices
        k = int(math.ceil(ratio * sz))
        parts.append(order[start:start + k])
        new_sizes.append(k)
        start += sz
    perm = jnp.concatenate(parts)

    gate = score[perm].astype(x.dtype)[:, None]
    x_new = x[perm] * gate                       # gate kept nodes by their tanh score (bf16)

    # filter_adj: sublane-axis row gather in XLA; column permutation as a one-hot matmul
    # on the MXU (avoids the poorly-lowering lane-axis gather).  Stays bf16 end to end.
    # TODO(synk): fuse the row gather into the next GAT layer's kernels via
    # PrefetchScalarGridSpec (perm as scalar prefetch + pl.Element row index_map).
    adj_rows = adj[perm]                                               # [K, N_old] bf16
    P = (jnp.arange(adj.shape[0])[:, None] == perm[None, :]).astype(adj.dtype)  # [N_old, K]
    adj_new = jnp.dot(adj_rows, P)                                     # exact 0/1, bf16

    batch_new = batch[perm]
    return x_new, adj_new, batch_new, tuple(new_sizes)


def readout(x, batch, num_graphs, Wfc, bfc):
    """avg_pool over graphs + fc1 + log_softmax (cannot fuse into gc2: pooling in between)."""
    nout, ncls = Wfc.shape
    onehot = (batch[None, :] == jnp.arange(num_graphs)[:, None]).astype(jnp.float32)  # [G,N]
    pool = onehot / jnp.sum(onehot, axis=1, keepdims=True)                             # mean pooling
    Wp = jnp.zeros((LANES, LANES), jnp.float32).at[:nout, :ncls].set(Wfc.astype(jnp.float32))
    bp = jnp.zeros((1, LANES), jnp.float32).at[0, :ncls].set(bfc.astype(jnp.float32))
    out = pl.pallas_call(
        functools.partial(readout_kernel, ncls=ncls),
        out_shape=jax.ShapeDtypeStruct((num_graphs, LANES), jnp.float32),
        in_specs=[_vmem() for _ in range(4)],
        out_specs=_vmem(),
    )(pool, x, Wp, bp)
    return out[:, :ncls]


@functools.partial(jax.jit, static_argnames=("graph_sizes", "ratio"))
def gat_forward(params, x, adj, batch, graph_sizes, ratio=0.8):
    N = x.shape[0]
    # Self-loops once at setup (GATConv add_self_loops); the diagonal survives TopK
    # filtering.  adj is carried in bf16 (entries exactly 0/1 -> lossless) from here on.
    adj = jnp.maximum(adj, jnp.eye(N, dtype=adj.dtype)).astype(jnp.bfloat16)
    x = _pad_lanes(x).astype(jnp.bfloat16)

    x, s1 = gat_layer(x, adj, *params["gc1"], params["pool1"])
    x, adj, batch, graph_sizes = topk_pool(x, s1, adj, batch, graph_sizes, ratio)
    # F.dropout(training=False) is the identity (inference mode).
    x, s2 = gat_layer(x, adj, *params["gc2"], params["pool2"])
    x, adj, batch, graph_sizes = topk_pool(x, s2, adj, batch, graph_sizes, ratio)
    return readout(x, batch, len(graph_sizes), params["fc1"][0], params["fc1"][1])


# ------------------------------- main ----------------------------------------

if __name__ == "__main__":
    nfeat, nhid, nout = 8, 16, 8
    nodes_per_graph, num_graphs = 8, 2
    N = nodes_per_graph * num_graphs

    key = jax.random.PRNGKey(0)
    ks = jax.random.split(key, 12)

    def glorot(k, shape):
        fan_in, fan_out = shape[0], shape[-1]
        s = math.sqrt(6.0 / (fan_in + fan_out))
        return jax.random.uniform(k, shape, jnp.float32, -s, s)

    # node features
    x = jax.random.normal(ks[0], (N, nfeat), jnp.float32)

    # deterministic connectivity: bidirectional ring + one chord per graph
    adj = jnp.zeros((N, N), jnp.float32)
    for g in range(num_graphs):
        o = g * nodes_per_graph
        for i in range(nodes_per_graph):
            a, b = o + i, o + (i + 1) % nodes_per_graph
            adj = adj.at[a, b].set(1.0).at[b, a].set(1.0)
        adj = adj.at[o, o + 3].set(1.0).at[o + 3, o].set(1.0)
    batch = jnp.repeat(jnp.arange(num_graphs, dtype=jnp.int32), nodes_per_graph)
    graph_sizes = (nodes_per_graph,) * num_graphs

    params = {
        "gc1": (glorot(ks[1], (nfeat, nhid)),        # W
                glorot(ks[2], (nhid,)),              # att_src
                glorot(ks[3], (nhid,)),              # att_dst
                jnp.zeros((nhid,), jnp.float32)),    # bias
        "pool1": glorot(ks[4], (nhid,)),             # TopKPooling projection p
        "gc2": (glorot(ks[5], (nhid, nout)),
                glorot(ks[6], (nout,)),
                glorot(ks[7], (nout,)),
                jnp.zeros((nout,), jnp.float32)),
        "pool2": glorot(ks[8], (nout,)),
        "fc1": (glorot(ks[9], (nout, 3)),
                jnp.zeros((3,), jnp.float32)),
    }

    out = gat_forward(params, x, adj, batch, graph_sizes, ratio=0.8)
    out = jax.block_until_ready(out)
    assert out.shape == (num_graphs, 3)
    assert bool(jnp.all(jnp.isfinite(out)))
    print("KERNEL_OK")
</pallas_src>

<mosaic_0001>
module attributes {stable_mosaic.version = 11 : i64} {
  func.func @xw_kernel(%arg0: i32, %arg1: memref<16x128xbf16, #tpu.memory_space<vmem>>, %arg2: memref<128x128xbf16, #tpu.memory_space<vmem>>, %arg3: memref<16x128xbf16, #tpu.memory_space<vmem>>) attributes {dimension_semantics = [#tpu.dimension_semantics<parallel>], iteration_bounds = array<i64: 1>, scalar_prefetch = 0 : i64, scratch_operands = 0 : i64, tpu.core_type = #tpu.core_type<tc>, window_params = [{transform_indices = @transform_0, window_bounds = array<i64: 16, 128>}, {pipeline_mode = #tpu.pipeline_mode<synchronous>, transform_indices = @transform_1, window_bounds = array<i64: 128, 128>}, {transform_indices = @transform_2, window_bounds = array<i64: 16, 128>}]} {
    %c0 = arith.constant 0 : index
    %c0_0 = arith.constant 0 : index
    %0 = vector.load %arg1[%c0, %c0_0] : memref<16x128xbf16, #tpu.memory_space<vmem>>, vector<16x128xbf16>
    %c0_1 = arith.constant 0 : index
    %c0_2 = arith.constant 0 : index
    %1 = vector.load %arg2[%c0_1, %c0_2] : memref<128x128xbf16, #tpu.memory_space<vmem>>, vector<128x128xbf16>
    %cst = arith.constant dense<0.000000e+00> : vector<16x128xf32>
    %2 = tpu.matmul %0, %1, %cst {dimension_numbers = #tpu.dot_dimension_numbers<[1], [0], [0], [1], [0, 0, 1, 1], [], []>} : vector<16x128xbf16>, vector<128x128xbf16>, vector<16x128xf32> -> vector<16x128xf32>
    %3 = arith.truncf %2 : vector<16x128xf32> to vector<16x128xbf16>
    %c0_3 = arith.constant 0 : index
    %c0_4 = arith.constant 0 : index
    %4 = vector.load %arg3[%c0_3, %c0_4] : memref<16x128xbf16, #tpu.memory_space<vmem>>, vector<16x128xbf16>
    tpu.vector_store %arg3[%c0_3, %c0_4], %3 {strides = array<i32>} : memref<16x128xbf16, #tpu.memory_space<vmem>>, vector<16x128xbf16>,
    return
  }
  func.func @transform_0(%arg0: i32) -> (i32, i32) {
    %c0_i32 = arith.constant 0 : i32
    %c0_i32_0 = arith.constant 0 : i32
    return %arg0, %c0_i32 : i32, i32
  }
  func.func @transform_1(%arg0: i32) -> (i32, i32) {
    %c0_i32 = arith.constant 0 : i32
    %c0_i32_0 = arith.constant 0 : i32
    %c0_i32_1 = arith.constant 0 : i32
    return %c0_i32, %c0_i32_0 : i32, i32
  }
  func.func @transform_2(%arg0: i32) -> (i32, i32) {
    %c0_i32 = arith.constant 0 : i32
    %c0_i32_0 = arith.constant 0 : i32
    return %arg0, %c0_i32 : i32, i32
  }
}

module attributes {stable_mosaic.version = 11 : i64} {
  func.func @gat_attn_kernel(%arg0: i32, %arg1: memref<16x128xbf16, #tpu.memory_space<vmem>>, %arg2: memref<16x16xbf16, #tpu.memory_space<vmem>>, %arg3: memref<1x128xbf16, #tpu.memory_space<vmem>>, %arg4: memref<1x128xf32, #tpu.memory_space<vmem>>, %arg5: memref<1x128xf32, #tpu.memory_space<vmem>>, %arg6: memref<16x128xbf16, #tpu.memory_space<vmem>>) attributes {dimension_semantics = [#tpu.dimension_semantics<parallel>], iteration_bounds = array<i64: 1>, scalar_prefetch = 0 : i64, scratch_operands = 0 : i64, tpu.core_type = #tpu.core_type<tc>, window_params = [{pipeline_mode = #tpu.pipeline_mode<synchronous>, transform_indices = @transform_0, window_bounds = array<i64: 16, 128>}, {transform_indices = @transform_1, window_bounds = array<i64: 16, 16>}, {pipeline_mode = #tpu.pipeline_mode<synchronous>, transform_indices = @transform_2, window_bounds = array<i64: 1, 128>}, {pipeline_mode = #tpu.pipeline_mode<synchronous>, transform_indices = @transform_3, window_bounds = array<i64: 1, 128>}, {pipeline_mode = #tpu.pipeline_mode<synchronous>, transform_indices = @transform_4, window_bounds = array<i64: 1, 128>}, {transform_indices = @transform_5, window_bounds = array<i64: 16, 128>}]} {
    %c16_i32 = arith.constant 16 : i32
    %0 = arith.muli %arg0, %c16_i32 : i32
    %1 = tpu.assume_multiple %0, 16 : i32
    %c0 = arith.constant 0 : index
    %c0_0 = arith.constant 0 : index
    %2 = vector.load %arg1[%c0, %c0_0] : memref<16x128xbf16, #tpu.memory_space<vmem>>, vector<16x128xbf16>
    %3 = arith.index_cast %1 : i32 to index
    %c0_1 = arith.constant 0 : index
    %4 = vector.load %arg1[%3, %c0_1] : memref<16x128xbf16, #tpu.memory_space<vmem>>, vector<16x128xbf16>
    %5 = vector.extract_strided_slice %4 {offsets = [0, 16], sizes = [16, 1], strides = [1, 1]} : vector<16x128xbf16> to vector<16x1xbf16>
    %6 = arith.extf %5 : vector<16x1xbf16> to vector<16x1xf32>
    %c0_2 = arith.constant 0 : index
    %c0_3 = arith.constant 0 : index
    %7 = vector.load %arg3[%c0_2, %c0_3] : memref<1x128xbf16, #tpu.memory_space<vmem>>, vector<1x128xbf16>
    %cst = arith.constant dense<0.000000e+00> : vector<1x16xf32>
    %8 = tpu.matmul %7, %2, %cst {dimension_numbers = #tpu.dot_dimension_numbers<[1], [1], [0], [0], [0, 0, 1, 0], [], []>} : vector<1x128xbf16>, vector<16x128xbf16>, vector<1x16xf32> -> vector<1x16xf32>
    %9 = vector.broadcast %6 : vector<16x1xf32> to vector<16x16xf32>
    %10 = vector.broadcast %8 : vector<1x16xf32> to vector<16x16xf32>
    %11 = arith.addf %9, %10 : vector<16x16xf32>
    %cst_4 = arith.constant 0.000000e+00 : f32
    %12 = vector.broadcast %cst_4 : f32 to vector<16x16xf32>
    %13 = arith.cmpf oge, %11, %12 : vector<16x16xf32>
    %cst_5 = arith.constant 2.000000e-01 : f32
    %14 = vector.broadcast %cst_5 : f32 to vector<16x16xf32>
    %15 = arith.mulf %14, %11 : vector<16x16xf32>
    %16 = arith.select %13, %11, %15 : vector<16x16xi1>, vector<16x16xf32>
    %c0_6 = arith.constant 0 : index
    %c0_7 = arith.constant 0 : index
    %17 = vector.load %arg2[%c0_6, %c0_7] : memref<16x16xbf16, #tpu.memory_space<vmem>>, vector<16x16xbf16>
    %cst_8 = arith.constant 5.000000e-01 : bf16
    %18 = vector.broadcast %cst_8 : bf16 to vector<16x16xbf16>
    %19 = arith.cmpf ogt, %17, %18 : vector<16x16xbf16>
    %cst_9 = arith.constant -1.000000e+30 : f32
    %20 = vector.broadcast %cst_9 : f32 to vector<16x16xf32>
    %21 = arith.select %19, %16, %20 : vector<16x16xi1>, vector<16x16xf32>
    %cst_10 = arith.constant dense<0xFF800000> : vector<16xf32>
    %22 = vector.multi_reduction <maximumf>, %21, %cst_10 [1] : vector<16x16xf32> to vector<16xf32>
    %23 = vector.shape_cast %22 : vector<16xf32> to vector<16x1xf32>
    %24 = vector.broadcast %23 : vector<16x1xf32> to vector<16x16xf32>
    %25 = arith.subf %21, %24 : vector<16x16xf32>
    %26 = math.exp %25 : vector<16x16xf32>
    %cst_11 = arith.constant dense<0.000000e+00> : vector<16xf32>
    %27 = vector.multi_reduction <add>, %26, %cst_11 [1] : vector<16x16xf32> to vector<16xf32>
    %28 = vector.shape_cast %27 : vector<16xf32> to vector<16x1xf32>
    %29 = tpu.reciprocal %28 {approx = true} : vector<16x1xf32> -> vector<16x1xf32>
    %30 = vector.broadcast %29 : vector<16x1xf32> to vector<16x16xf32>
    %31 = arith.mulf %26, %30 : vector<16x16xf32>
    %32 = arith.truncf %31 : vector<16x16xf32> to vector<16x16xbf16>
    %cst_12 = arith.constant dense<0.000000e+00> : vector<16x128xf32>
    %33 = tpu.matmul %32, %2, %cst_12 {dimension_numbers = #tpu.dot_dimension_numbers<[1], [0], [0], [1], [0, 0, 1, 1], [], []>} : vector<16x16xbf16>, vector<16x128xbf16>, vector<16x128xf32> -> vector<16x128xf32>
    %c0_13 = arith.constant 0 : index
    %c0_14 = arith.constant 0 : index
    %34 = vector.load %arg4[%c0_13, %c0_14] : memref<1x128xf32, #tpu.memory_space<vmem>>, vector<1x128xf32>
    %35 = vector.broadcast %34 : vector<1x128xf32> to vector<16x128xf32>
    %36 = arith.addf %33, %35 : vector<16x128xf32>
    %cst_15 = arith.constant 0.000000e+00 : f32
    %37 = vector.broadcast %cst_15 : f32 to vector<16x128xf32>
    %38 = arith.maximumf %36, %37 : vector<16x128xf32>
    %c0_16 = arith.constant 0 : index
    %c0_17 = arith.constant 0 : index
    %39 = vector.load %arg5[%c0_16, %c0_17] : memref<1x128xf32, #tpu.memory_space<vmem>>, vector<1x128xf32>
    %40 = vector.broadcast %39 : vector<1x128xf32> to vector<16x128xf32>
    %41 = arith.mulf %38, %40 : vector<16x128xf32>
    %cst_18 = arith.constant dense<0.000000e+00> : vector<16xf32>
    %42 = vector.multi_reduction <add>, %41, %cst_18 [1] : vector<16x128xf32> to vector<16xf32>
    %43 = vector.shape_cast %42 : vector<16xf32> to vector<16x1xf32>
    %44 = math.tanh %43 : vector<16x1xf32>
    %45 = tpu.iota {dimensions = array<i32: 1>} : vector<16x128xi32>
    %c16_i32_19 = arith.constant 16 : i32
    %46 = vector.broadcast %c16_i32_19 : i32 to vector<16x128xi32>
    %47 = arith.cmpi slt, %45, %46 : vector<16x128xi32>
    %48 = vector.shape_cast %44 : vector<16x1xf32> to vector<16x1xf32>
    %49 = vector.broadcast %48 : vector<16x1xf32> to vector<16x128xf32>
    %50 = arith.select %47, %38, %49 : vector<16x128xi1>, vector<16x128xf32>
    %51 = arith.truncf %50 : vector<16x128xf32> to vector<16x128xbf16>
    %c0_20 = arith.constant 0 : index
    %c0_21 = arith.constant 0 : index
    %52 = vector.load %arg6[%c0_20, %c0_21] : memref<16x128xbf16, #tpu.memory_space<vmem>>, vector<16x128xbf16>
    tpu.vector_store %arg6[%c0_20, %c0_21], %51 {strides = array<i32>} : memref<16x128xbf16, #tpu.memory_space<vmem>>, vector<16x128xbf16>,
    return
  }
  func.func @transform_0(%arg0: i32) -> (i32, i32) {
    %c0_i32 = arith.constant 0 : i32
    %c0_i32_0 = arith.constant 0 : i32
    %c0_i32_1 = arith.constant 0 : i32
    return %c0_i32, %c0_i32_0 : i32, i32
  }
  func.func @transform_1(%arg0: i32) -> (i32, i32) {
    %c0_i32 = arith.constant 0 : i32
    %c0_i32_0 = arith.constant 0 : i32
    return %arg0, %c0_i32 : i32, i32
  }
  func.func @transform_2(%arg0: i32) -> (i32, i32) {
    %c0_i32 = arith.constant 0 : i32
    %c0_i32_0 = arith.constant 0 : i32
    %c0_i32_1 = arith.constant 0 : i32
    return %c0_i32, %c0_i32_0 : i32, i32
  }
  func.func @transform_3(%arg0: i32) -> (i32, i32) {
    %c0_i32 = arith.constant 0 : i32
    %c0_i32_0 = arith.constant 0 : i32
    %c0_i32_1 = arith.constant 0 : i32
    return %c0_i32, %c0_i32_0 : i32, i32
  }
  func.func @transform_4(%arg0: i32) -> (i32, i32) {
    %c0_i32 = arith.constant 0 : i32
    %c0_i32_0 = arith.constant 0 : i32
    %c0_i32_1 = arith.constant 0 : i32
    return %c0_i32, %c0_i32_0 : i32, i32
  }
  func.func @transform_5(%arg0: i32) -> (i32, i32) {
    %c0_i32 = arith.constant 0 : i32
    %c0_i32_0 = arith.constant 0 : i32
    return %arg0, %c0_i32 : i32, i32
  }
}

module attributes {stable_mosaic.version = 11 : i64} {
  func.func @gat_attn_kernel(%arg0: i32, %arg1: memref<16x128xbf16, #tpu.memory_space<vmem>>, %arg2: memref<16x16xbf16, #tpu.memory_space<vmem>>, %arg3: memref<1x128xbf16, #tpu.memory_space<vmem>>, %arg4: memref<1x128xf32, #tpu.memory_space<vmem>>, %arg5: memref<1x128xf32, #tpu.memory_space<vmem>>, %arg6: memref<16x128xbf16, #tpu.memory_space<vmem>>) attributes {dimension_semantics = [#tpu.dimension_semantics<parallel>], iteration_bounds = array<i64: 1>, scalar_prefetch = 0 : i64, scratch_operands = 0 : i64, tpu.core_type = #tpu.core_type<tc>, window_params = [{pipeline_mode = #tpu.pipeline_mode<synchronous>, transform_indices = @transform_0, window_bounds = array<i64: 16, 128>}, {transform_indices = @transform_1, window_bounds = array<i64: 16, 16>}, {pipeline_mode = #tpu.pipeline_mode<synchronous>, transform_indices = @transform_2, window_bounds = array<i64: 1, 128>}, {pipeline_mode = #tpu.pipeline_mode<synchronous>, transform_indices = @transform_3, window_bounds = array<i64: 1, 128>}, {pipeline_mode = #tpu.pipeline_mode<synchronous>, transform_indices = @transform_4, window_bounds = array<i64: 1, 128>}, {transform_indices = @transform_5, window_bounds = array<i64: 16, 128>}]} {
    %c16_i32 = arith.constant 16 : i32
    %0 = arith.muli %arg0, %c16_i32 : i32
    %1 = tpu.assume_multiple %0, 16 : i32
    %c0 = arith.constant 0 : index
    %c0_0 = arith.constant 0 : index
    %2 = vector.load %arg1[%c0, %c0_0] : memref<16x128xbf16, #tpu.memory_space<vmem>>, vector<16x128xbf16>
    %3 = arith.index_cast %1 : i32 to index
    %c0_1 = arith.constant 0 : index
    %4 = vector.load %arg1[%3, %c0_1] : memref<16x128xbf16, #tpu.memory_space<vmem>>, vector<16x128xbf16>
    %5 = vector.extract_strided_slice %4 {offsets = [0, 8], sizes = [16, 1], strides = [1, 1]} : vector<16x128xbf16> to vector<16x1xbf16>
    %6 = arith.extf %5 : vector<16x1xbf16> to vector<16x1xf32>
    %c0_2 = arith.constant 0 : index
    %c0_3 = arith.constant 0 : index
    %7 = vector.load %arg3[%c0_2, %c0_3] : memref<1x128xbf16, #tpu.memory_space<vmem>>, vector<1x128xbf16>
    %cst = arith.constant dense<0.000000e+00> : vector<1x16xf32>
    %8 = tpu.matmul %7, %2, %cst {dimension_numbers = #tpu.dot_dimension_numbers<[1], [1], [0], [0], [0, 0, 1, 0], [], []>} : vector<1x128xbf16>, vector<16x128xbf16>, vector<1x16xf32> -> vector<1x16xf32>
    %9 = vector.broadcast %6 : vector<16x1xf32> to vector<16x16xf32>
    %10 = vector.broadcast %8 : vector<1x16xf32> to vector<16x16xf32>
    %11 = arith.addf %9, %10 : vector<16x16xf32>
    %cst_4 = arith.constant 0.000000e+00 : f32
    %12 = vector.broadcast %cst_4 : f32 to vector<16x16xf32>
    %13 = arith.cmpf oge, %11, %12 : vector<16x16xf32>
    %cst_5 = arith.constant 2.000000e-01 : f32
    %14 = vector.broadcast %cst_5 : f32 to vector<16x16xf32>
    %15 = arith.mulf %14, %11 : vector<16x16xf32>
    %16 = arith.select %13, %11, %15 : vector<16x16xi1>, vector<16x16xf32>
    %c0_6 = arith.constant 0 : index
    %c0_7 = arith.constant 0 : index
    %17 = vector.load %arg2[%c0_6, %c0_7] : memref<16x16xbf16, #tpu.memory_space<vmem>>, vector<16x16xbf16>
    %cst_8 = arith.constant 5.000000e-01 : bf16
    %18 = vector.broadcast %cst_8 : bf16 to vector<16x16xbf16>
    %19 = arith.cmpf ogt, %17, %18 : vector<16x16xbf16>
    %cst_9 = arith.constant -1.000000e+30 : f32
    %20 = vector.broadcast %cst_9 : f32 to vector<16x16xf32>
    %21 = arith.select %19, %16, %20 : vector<16x16xi1>, vector<16x16xf32>
    %cst_10 = arith.constant dense<0xFF800000> : vector<16xf32>
    %22 = vector.multi_reduction <maximumf>, %21, %cst_10 [1] : vector<16x16xf32> to vector<16xf32>
    %23 = vector.shape_cast %22 : vector<16xf32> to vector<16x1xf32>
    %24 = vector.broadcast %23 : vector<16x1xf32> to vector<16x16xf32>
    %25 = arith.subf %21, %24 : vector<16x16xf32>
    %26 = math.exp %25 : vector<16x16xf32>
    %cst_11 = arith.constant dense<0.000000e+00> : vector<16xf32>
    %27 = vector.multi_reduction <add>, %26, %cst_11 [1] : vector<16x16xf32> to vector<16xf32>
    %28 = vector.shape_cast %27 : vector<16xf32> to vector<16x1xf32>
    %29 = tpu.reciprocal %28 {approx = true} : vector<16x1xf32> -> vector<16x1xf32>
    %30 = vector.broadcast %29 : vector<16x1xf32> to vector<16x16xf32>
    %31 = arith.mulf %26, %30 : vector<16x16xf32>
    %32 = arith.truncf %31 : vector<16x16xf32> to vector<16x16xbf16>
    %cst_12 = arith.constant dense<0.000000e+00> : vector<16x128xf32>
    %33 = tpu.matmul %32, %2, %cst_12 {dimension_numbers = #tpu.dot_dimension_numbers<[1], [0], [0], [1], [0, 0, 1, 1], [], []>} : vector<16x16xbf16>, vector<16x128xbf16>, vector<16x128xf32> -> vector<16x128xf32>
    %c0_13 = arith.constant 0 : index
    %c0_14 = arith.constant 0 : index
    %34 = vector.load %arg4[%c0_13, %c0_14] : memref<1x128xf32, #tpu.memory_space<vmem>>, vector<1x128xf32>
    %35 = vector.broadcast %34 : vector<1x128xf32> to vector<16x128xf32>
    %36 = arith.addf %33, %35 : vector<16x128xf32>
    %cst_15 = arith.constant 0.000000e+00 : f32
    %37 = vector.broadcast %cst_15 : f32 to vector<16x128xf32>
    %38 = arith.maximumf %36, %37 : vector<16x128xf32>
    %c0_16 = arith.constant 0 : index
    %c0_17 = arith.constant 0 : index
    %39 = vector.load %arg5[%c0_16, %c0_17] : memref<1x128xf32, #tpu.memory_space<vmem>>, vector<1x128xf32>
    %40 = vector.broadcast %39 : vector<1x128xf32> to vector<16x128xf32>
    %41 = arith.mulf %38, %40 : vector<16x128xf32>
    %cst_18 = arith.constant dense<0.000000e+00> : vector<16xf32>
    %42 = vector.multi_reduction <add>, %41, %cst_18 [1] : vector<16x128xf32> to vector<16xf32>
    %43 = vector.shape_cast %42 : vector<16xf32> to vector<16x1xf32>
    %44 = math.tanh %43 : vector<16x1xf32>
    %45 = tpu.iota {dimensions = array<i32: 1>} : vector<16x128xi32>
    %c8_i32 = arith.constant 8 : i32
    %46 = vector.broadcast %c8_i32 : i32 to vector<16x128xi32>
    %47 = arith.cmpi slt, %45, %46 : vector<16x128xi32>
    %48 = vector.shape_cast %44 : vector<16x1xf32> to vector<16x1xf32>
    %49 = vector.broadcast %48 : vector<16x1xf32> to vector<16x128xf32>
    %50 = arith.select %47, %38, %49 : vector<16x128xi1>, vector<16x128xf32>
    %51 = arith.truncf %50 : vector<16x128xf32> to vector<16x128xbf16>
    %c0_19 = arith.constant 0 : index
    %c0_20 = arith.constant 0 : index
    %52 = vector.load %arg6[%c0_19, %c0_20] : memref<16x128xbf16, #tpu.memory_space<vmem>>, vector<16x128xbf16>
    tpu.vector_store %arg6[%c0_19, %c0_20], %51 {strides = array<i32>} : memref<16x128xbf16, #tpu.memory_space<vmem>>, vector<16x128xbf16>,
    return
  }
  func.func @transform_0(%arg0: i32) -> (i32, i32) {
    %c0_i32 = arith.constant 0 : i32
    %c0_i32_0 = arith.constant 0 : i32
    %c0_i32_1 = arith.constant 0 : i32
    return %c0_i32, %c0_i32_0 : i32, i32
  }
  func.func @transform_1(%arg0: i32) -> (i32, i32) {
    %c0_i32 = arith.constant 0 : i32
    %c0_i32_0 = arith.constant 0 : i32
    return %arg0, %c0_i32 : i32, i32
  }
  func.func @transform_2(%arg0: i32) -> (i32, i32) {
    %c0_i32 = arith.constant 0 : i32
    %c0_i32_0 = arith.constant 0 : i32
    %c0_i32_1 = arith.constant 0 : i32
    return %c0_i32, %c0_i32_0 : i32, i32
  }
  func.func @transform_3(%arg0: i32) -> (i32, i32) {
    %c0_i32 = arith.constant 0 : i32
    %c0_i32_0 = arith.constant 0 : i32
    %c0_i32_1 = arith.constant 0 : i32
    return %c0_i32, %c0_i32_0 : i32, i32
  }
  func.func @transform_4(%arg0: i32) -> (i32, i32) {
    %c0_i32 = arith.constant 0 : i32
    %c0_i32_0 = arith.constant 0 : i32
    %c0_i32_1 = arith.constant 0 : i32
    return %c0_i32, %c0_i32_0 : i32, i32
  }
  func.func @transform_5(%arg0: i32) -> (i32, i32) {
    %c0_i32 = arith.constant 0 : i32
    %c0_i32_0 = arith.constant 0 : i32
    return %arg0, %c0_i32 : i32, i32
  }
}

module attributes {stable_mosaic.version = 11 : i64} {
  func.func @readout_kernel(%arg0: memref<2x12xf32, #tpu.memory_space<vmem>>, %arg1: memref<12x128xbf16, #tpu.memory_space<vmem>>, %arg2: memref<128x128xf32, #tpu.memory_space<vmem>>, %arg3: memref<1x128xf32, #tpu.memory_space<vmem>>, %arg4: memref<2x128xf32, #tpu.memory_space<vmem>>) attributes {dimension_semantics = [], scalar_prefetch = 0 : i64, scratch_operands = 0 : i64, tpu.core_type = #tpu.core_type<tc>} {
    %c0 = arith.constant 0 : index
    %c0_0 = arith.constant 0 : index
    %0 = vector.load %arg0[%c0, %c0_0] : memref<2x12xf32, #tpu.memory_space<vmem>>, vector<2x12xf32>
    %c0_1 = arith.constant 0 : index
    %c0_2 = arith.constant 0 : index
    %1 = vector.load %arg1[%c0_1, %c0_2] : memref<12x128xbf16, #tpu.memory_space<vmem>>, vector<12x128xbf16>
    %2 = arith.extf %1 : vector<12x128xbf16> to vector<12x128xf32>
    %cst = arith.constant dense<0.000000e+00> : vector<2x128xf32>
    %3 = tpu.matmul %0, %2, %cst {dimension_numbers = #tpu.dot_dimension_numbers<[1], [0], [0], [1], [0, 0, 1, 1], [], []>} : vector<2x12xf32>, vector<12x128xf32>, vector<2x128xf32> -> vector<2x128xf32>
    %c0_3 = arith.constant 0 : index
    %c0_4 = arith.constant 0 : index
    %4 = vector.load %arg2[%c0_3, %c0_4] : memref<128x128xf32, #tpu.memory_space<vmem>>, vector<128x128xf32>
    %cst_5 = arith.constant dense<0.000000e+00> : vector<2x128xf32>
    %5 = tpu.matmul %3, %4, %cst_5 {dimension_numbers = #tpu.dot_dimension_numbers<[1], [0], [0], [1], [0, 0, 1, 1], [], []>} : vector<2x128xf32>, vector<128x128xf32>, vector<2x128xf32> -> vector<2x128xf32>
    %c0_6 = arith.constant 0 : index
    %c0_7 = arith.constant 0 : index
    %6 = vector.load %arg3[%c0_6, %c0_7] : memref<1x128xf32, #tpu.memory_space<vmem>>, vector<1x128xf32>
    %7 = vector.broadcast %6 : vector<1x128xf32> to vector<2x128xf32>
    %8 = arith.addf %5, %7 : vector<2x128xf32>
    %9 = tpu.iota {dimensions = array<i32: 1>} : vector<2x128xi32>
    %c3_i32 = arith.constant 3 : i32
    %10 = vector.broadcast %c3_i32 : i32 to vector<2x128xi32>
    %11 = arith.cmpi slt, %9, %10 : vector<2x128xi32>
    %cst_8 = arith.constant -1.000000e+30 : f32
    %12 = vector.broadcast %cst_8 : f32 to vector<2x128xf32>
    %13 = arith.select %11, %8, %12 : vector<2x128xi1>, vector<2x128xf32>
    %cst_9 = arith.constant dense<0xFF800000> : vector<2xf32>
    %14 = vector.multi_reduction <maximumf>, %13, %cst_9 [1] : vector<2x128xf32> to vector<2xf32>
    %15 = vector.shape_cast %14 : vector<2xf32> to vector<2x1xf32>
    %16 = vector.broadcast %15 : vector<2x1xf32> to vector<2x128xf32>
    %17 = arith.subf %13, %16 : vector<2x128xf32>
    %18 = math.exp %17 : vector<2x128xf32>
    %cst_10 = arith.constant dense<0.000000e+00> : vector<2xf32>
    %19 = vector.multi_reduction <add>, %18, %cst_10 [1] : vector<2x128xf32> to vector<2xf32>
    %20 = vector.shape_cast %19 : vector<2xf32> to vector<2x1xf32>
    %21 = math.log %20 : vector<2x1xf32>
    %22 = arith.addf %15, %21 : vector<2x1xf32>
    %23 = vector.broadcast %22 : vector<2x1xf32> to vector<2x128xf32>
    %24 = arith.subf %8, %23 : vector<2x128xf32>
    %cst_11 = arith.constant 0.000000e+00 : f32
    %25 = vector.broadcast %cst_11 : f32 to vector<2x128xf32>
    %26 = arith.select %11, %24, %25 : vector<2x128xi1>, vector<2x128xf32>
    %c0_12 = arith.constant 0 : index
    %c0_13 = arith.constant 0 : index
    %27 = vector.load %arg4[%c0_12, %c0_13] : memref<2x128xf32, #tpu.memory_space<vmem>>, vector<2x128xf32>
    tpu.vector_store %arg4[%c0_12, %c0_13], %26 {strides = array<i32>} : memref<2x128xf32, #tpu.memory_space<vmem>>, vector<2x128xf32>,
    return
  }
}

</mosaic_0001>

<llo_original>
// kernel: gat_forward.5
$region0: #{gat_forward.5}
  #allocation0 [shape = 'u32[]', space=smem, size = 0x4, offset = 0x4, fixed_abs, tag = 'smem constant byte address 0x4 - core index']
  #allocation1 [shape = 'u32[144,128]{1,0:T(1,128)}', space=vmem, size = 0x12000, scoped, tag = 'internal scratch']
  %s0 = inlined_call_operand.vmem [shape: bf16[16,128], index: 0, kind: input, shape index: {}]
  %s1 = inlined_call_operand.vmem [shape: bf16[128,128], index: 1, kind: input, shape index: {}]
  %s2 = inlined_call_operand.vmem [shape: bf16[16,128], index: 2, kind: output, shape index: {}]
  %s3 = sld [smem:[#allocation0]]
  $region18: #{gat_forward.5} parent=0
    _
  %s5 = ssub.s32 1, %s3
  %s6 = scalar_select 0, %s5, %s3
  // Predicated region
  $region2: #{gat_forward.5} parent=0 // pred_check
    _
  $region3: #{gat_forward.5} parent=0 // pred_check_branch
    %8 = sbr.rel (0) target = $region5
  $region4: #{gat_forward.5} parent=0 // pred_region
    _
  $region5: #{gat_forward.5} parent=0 // pred_fallthru
    _
  // Predicated region
  $region6: #{gat_forward.5} parent=0 // pred_check
    _
  $region7: #{gat_forward.5} parent=0 // pred_check_branch
    %10 = sbr.rel (0) target = $region9
  $region8: #{gat_forward.5} parent=0 // pred_region
    _
  $region9: #{gat_forward.5} parent=0 // pred_fallthru
    _
  %v12 = vld [vmem:[%s0] sm:$0xf]
  %v13 = vld [vmem:[%s0 + $0x4] sm:$0xf]
  %v14 = vld [vmem:[%s1] sm:$0xf]
  %v15 = vld [vmem:[%s1 + $0x4] sm:$0xf]
  %v16 = vld [vmem:[%s1 + $0x8] sm:$0xf]
  %v17 = vld [vmem:[%s1 + $0xc] sm:$0xf]
  %v18 = vld [vmem:[%s1 + $0x10] sm:$0xf]
  %v19 = vld [vmem:[%s1 + $0x14] sm:$0xf]
  %v20 = vld [vmem:[%s1 + $0x18] sm:$0xf]
  %v21 = vld [vmem:[%s1 + $0x1c] sm:$0xf]
  %v22 = vld [vmem:[%s1 + $0x20] sm:$0xf]
  %v23 = vld [vmem:[%s1 + $0x24] sm:$0xf]
  %v24 = vld [vmem:[%s1 + $0x28] sm:$0xf]
  %v25 = vld [vmem:[%s1 + $0x2c] sm:$0xf]
  %v26 = vld [vmem:[%s1 + $0x30] sm:$0xf]
  %v27 = vld [vmem:[%s1 + $0x34] sm:$0xf]
  %v28 = vld [vmem:[%s1 + $0x38] sm:$0xf]
  %v29 = vld [vmem:[%s1 + $0x3c] sm:$0xf]
  %v32 = vunpack.c.l.b16 %v12
  %v33 = vunpack.c.l.b16 %v13
  %v34 = vpack.c.b16 %v33, %v32
  %v52 = vunpack.c.l.b16 %v14
  %v53 = vunpack.c.l.b16 %v15
  %v54 = vunpack.c.l.b16 %v16
  %v55 = vunpack.c.l.b16 %v17
  %v56 = vunpack.c.l.b16 %v18
  %v57 = vunpack.c.l.b16 %v19
  %v58 = vunpack.c.l.b16 %v20
  %v59 = vunpack.c.l.b16 %v21
  %v60 = vunpack.c.l.b16 %v22
  %v61 = vunpack.c.l.b16 %v23
  %v62 = vunpack.c.l.b16 %v24
  %v63 = vunpack.c.l.b16 %v25
  %v64 = vunpack.c.l.b16 %v26
  %v65 = vunpack.c.l.b16 %v27
  %v66 = vunpack.c.l.b16 %v28
  %v67 = vunpack.c.l.b16 %v29
  %v68 = vpack.c.b16 %v53, %v52
  %v69 = vpack.c.b16 %v55, %v54
  %v70 = vpack.c.b16 %v57, %v56
  %v71 = vpack.c.b16 %v59, %v58
  %v72 = vpack.c.b16 %v61, %v60
  %v73 = vpack.c.b16 %v63, %v62
  %v74 = vpack.c.b16 %v65, %v64
  %v75 = vpack.c.b16 %v67, %v66
  %84 = vmatprep.subr.bf16.mxu0 0
  %85 = vmatpush1.bf16.msra.mxu0 %v68
  %86 = vmatprep.subr.bf16.mxu0 0
  %87 = vmatpush1.bf16.msra.mxu0 %v69
  %88 = vmatprep.subr.bf16.mxu0 0
  %89 = vmatpush1.bf16.msra.mxu0 %v70
  %90 = vmatprep.subr.bf16.mxu0 0
  %91 = vmatpush1.bf16.msra.mxu0 %v71
  %92 = vmatprep.subr.bf16.mxu0 0
  %93 = vmatpush1.bf16.msra.mxu0 %v72
  %94 = vmatprep.subr.bf16.mxu0 0
  %95 = vmatpush1.bf16.msra.mxu0 %v73
  %96 = vmatprep.subr.bf16.mxu0 0
  %97 = vmatpush1.bf16.msra.mxu0 %v74
  %98 = vmatprep.subr.bf16.mxu0 0
  %99 = vmatpush1.bf16.msra.mxu0 %v75
  %100 = vmatprep.subr.bf16.mxu0 0
  %101 = vmatpush1.bf16.msra.mxu0 0
  %102 = vmatprep.subr.bf16.mxu0 0
  %103 = vmatpush1.bf16.msra.mxu0 0
  %104 = vmatprep.subr.bf16.mxu0 0
  %105 = vmatpush1.bf16.msra.mxu0 0
  %106 = vmatprep.subr.bf16.mxu0 0
  %107 = vmatpush1.bf16.msra.mxu0 0
  %108 = vmatprep.subr.bf16.mxu0 0
  %109 = vmatpush1.bf16.msra.mxu0 0
  %110 = vmatprep.subr.bf16.mxu0 0
  %111 = vmatpush1.bf16.msra.mxu0 0
  %112 = vmatprep.subr.bf16.mxu0 0
  %113 = vmatpush1.bf16.msra.mxu0 0
  %114 = vmatprep.subr.bf16.mxu0 0
  %115 = vmatpush1.bf16.msra.mxu0 0
  %116 = vmatprep.mubr.bf16.mxu0 0
  %117 = vmatmul.mubr.bf16.gmra.mrb[0].mxu0 %v34
  %v118 = vpop.f32.mrb[0].mxu0
  %v119 = vadd.f32 0.0, %v118
  %v120 = vpop.f32.mrb[0].mxu0
  %v121 = vpop.f32.mrb[0].mxu0
  %v122 = vadd.f32 0.0, %v121
  %v123 = vpop.f32.mrb[0].mxu0
  %124 = vdwg.mxu0
  %v125 = vpack.c.bf16 %v122, %v119
  %v127 = vunpack.c.l.b16 %v125
  %v128 = vunpack.c.h.b16 %v125
  %v129 = vpack.c.b16 %v127, %v127
  %v130 = vpack.c.b16 %v128, %v128
  %133 = vst [vmem:[%s2] sm:$0xf] %v129
  %134 = vst [vmem:[%s2 + $0x4] sm:$0xf] %v130
  // Predicated region
  $region10: #{gat_forward.5} parent=0 // pred_check
    _
  $region11: #{gat_forward.5} parent=0 // pred_check_branch
    %136 = sbr.rel (0) target = $region13
  $region12: #{gat_forward.5} parent=0 // pred_region
    _
  $region13: #{gat_forward.5} parent=0 // pred_fallthru
    _
  // Predicated region
  $region14: #{gat_forward.5} parent=0 // pred_check
    _
  $region15: #{gat_forward.5} parent=0 // pred_check_branch
    %138 = sbr.rel (0) target = $region17
  $region16: #{gat_forward.5} parent=0 // pred_region
    _
  $region17: #{gat_forward.5} parent=0 // pred_fallthru
    _

// kernel: gat_forward.6
$region0: #{gat_forward.6}
  #allocation0 [shape = 'u32[]', space=smem, size = 0x4, offset = 0x4, fixed_abs, tag = 'smem constant byte address 0x4 - core index']
  #allocation1 [shape = 'u32[144,128]{1,0:T(1,128)}', space=vmem, size = 0x12000, scoped, tag = 'internal scratch']
  %s0 = inlined_call_operand.vmem [shape: bf16[16,128], index: 0, kind: input, shape index: {}]
  %s1 = inlined_call_operand.vmem [shape: bf16[16,16], index: 1, kind: input, shape index: {}]
  %s2 = inlined_call_operand.vmem [shape: bf16[1,128], index: 2, kind: input, shape index: {}]
  %s3 = inlined_call_operand.vmem [shape: f32[1,128], index: 3, kind: input, shape index: {}]
  %s4 = inlined_call_operand.vmem [shape: f32[1,128], index: 4, kind: input, shape index: {}]
  %s5 = inlined_call_operand.vmem [shape: bf16[16,128], index: 5, kind: output, shape index: {}]
  %s6 = sld [smem:[#allocation0]]
  $region30: #{gat_forward.6} parent=0
    _
  %s8 = ssub.s32 1, %s6
  %s9 = scalar_select 0, %s8, %s6
  // Predicated region
  $region2: #{gat_forward.6} parent=0 // pred_check
    _
  $region3: #{gat_forward.6} parent=0 // pred_check_branch
    %11 = sbr.rel (0) target = $region5
  $region4: #{gat_forward.6} parent=0 // pred_region
    _
  $region5: #{gat_forward.6} parent=0 // pred_fallthru
    _
  // Predicated region
  $region6: #{gat_forward.6} parent=0 // pred_check
    _
  $region7: #{gat_forward.6} parent=0 // pred_check_branch
    %13 = sbr.rel (0) target = $region9
  $region8: #{gat_forward.6} parent=0 // pred_region
    _
  $region9: #{gat_forward.6} parent=0 // pred_fallthru
    _
  // Predicated region
  $region10: #{gat_forward.6} parent=0 // pred_check
    _
  $region11: #{gat_forward.6} parent=0 // pred_check_branch
    %15 = sbr.rel (0) target = $region13
  $region12: #{gat_forward.6} parent=0 // pred_region
    _
  $region13: #{gat_forward.6} parent=0 // pred_fallthru
    _
  // Predicated region
  $region14: #{gat_forward.6} parent=0 // pred_check
    _
  $region15: #{gat_forward.6} parent=0 // pred_check_branch
    %17 = sbr.rel (0) target = $region17
  $region16: #{gat_forward.6} parent=0 // pred_region
    _
  $region17: #{gat_forward.6} parent=0 // pred_fallthru
    _
  // Predicated region
  $region18: #{gat_forward.6} parent=0 // pred_check
    _
  $region19: #{gat_forward.6} parent=0 // pred_check_branch
    %19 = sbr.rel (0) target = $region21
  $region20: #{gat_forward.6} parent=0 // pred_region
    _
  $region21: #{gat_forward.6} parent=0 // pred_fallthru
    _
  %s24 = smul.u32 0, 16
  %v25 = vld [vmem:[%s0] sm:$0xf]
  %v26 = vld [vmem:[%s0 + $0x4] sm:$0xf]
  %s27 = sshra.s32 %s24, 3
  %s28 = sand.u32 %s24, 7
  %s29 = smul.addr %s27, 4
  %s30 = scalar_lea.vmem %s0, %s29
  %v31 = vld [vmem:[%s30] sm:$0xf]
  %v32 = vld [vmem:[%s30 + $0x4] sm:$0xf]
  %v33 = vunpack.c.l.bf16 %v31
  %v34 = vunpack.c.l.bf16 %v32
  %v35 = vld [vmem:[%s2] sm:$0x1]
  %v38 = vunpack.c.l.b16 %v25
  %v39 = vunpack.c.l.b16 %v26
  %v40 = vpack.c.b16 %v39, %v38
  %42 = vmatprep.subr.bf16.mxu0 0
  %43 = vmatpush1.bf16.xpose.msra.mxu0 %v40
  %44 = vmatprep.subr.bf16.mxu0 0
  %45 = vmatpush1.bf16.xpose.msra.mxu0 0
  %46 = vmatprep.subr.bf16.mxu0 0
  %47 = vmatpush1.bf16.xpose.msra.mxu0 0
  %48 = vmatprep.subr.bf16.mxu0 0
  %49 = vmatpush1.bf16.xpose.msra.mxu0 0
  %50 = vmatprep.subr.bf16.mxu0 0
  %51 = vmatpush1.bf16.xpose.msra.mxu0 0
  %52 = vmatprep.subr.bf16.mxu0 0
  %53 = vmatpush1.bf16.xpose.msra.mxu0 0
  %54 = vmatprep.subr.bf16.mxu0 0
  %55 = vmatpush1.bf16.xpose.msra.mxu0 0
  %56 = vmatprep.subr.bf16.mxu0 0
  %57 = vmatpush1.bf16.xpose.msra.mxu0 0
  %58 = vmatprep.subr.bf16.mxu0 0
  %59 = vmatpush1.bf16.xpose.msra.mxu0 0
  %60 = vmatprep.subr.bf16.mxu0 0
  %61 = vmatpush1.bf16.xpose.msra.mxu0 0
  %62 = vmatprep.subr.bf16.mxu0 0
  %63 = vmatpush1.bf16.xpose.msra.mxu0 0
  %64 = vmatprep.subr.bf16.mxu0 0
  %65 = vmatpush1.bf16.xpose.msra.mxu0 0
  %66 = vmatprep.subr.bf16.mxu0 0
  %67 = vmatpush1.bf16.xpose.msra.mxu0 0
  %68 = vmatprep.subr.bf16.mxu0 0
  %69 = vmatpush1.bf16.xpose.msra.mxu0 0
  %70 = vmatprep.subr.bf16.mxu0 0
  %71 = vmatpush1.bf16.xpose.msra.mxu0 0
  %72 = vmatprep.subr.bf16.mxu0 0
  %73 = vmatpush1.bf16.xpose.msra.mxu0 0
  %74 = vmatprep.mubr.bf16.mxu0 0
  %75 = vmatmul.mubr.bf16.gmra.mrb[0].mxu0 %v35
  %v76 = vpop.f32.mrb[0].mxu0
  %v77 = vadd.f32 0.0, %v76
  %v78 = vpop.f32.mrb[0].mxu0
  %v79 = vpop.f32.mrb[0].mxu0
  %v80 = vpop.f32.mrb[0].mxu0
  %81 = vdwg.mxu0
  %83 = vset.pattern.permute.xlu0 16
  %84 = vperm.xlu0 %83, %v33
  %v85 = vpop.permute.xlu0 %84
  %88 = vset.pattern.permute.xlu0 16
  %89 = vperm.xlu0 %88, %v34
  %v90 = vpop.permute.xlu0 %89
  %v92 = vlaneseq
  %v93 = vshrl.u32 %v92, 7
  %v94 = vsub.s32 0, %v93
  %v95 = vrot.slane %v77, %v94
  %v96 = vadd.f32 %v85, %v95
  %v97 = vadd.f32 %v90, %v95
  %vm98 = vcmp.ge.f32.partialorder %v96, 0.0
  %vm99 = vcmp.ge.f32.partialorder %v97, 0.0
  %v100 = vmul.f32 %v96, 0.2
  %v101 = vmul.f32 %v97, 0.2
  %v102 = vsel %vm98, %v96, %v100
  %v103 = vsel %vm99, %v97, %v101
  %v104 = vld [vmem:[%s1] sm:$0xf]
  %v105 = vld [vmem:[%s1 + $0x4] sm:$0xf]
  %vm106 = vcmp.gt.bf16.partialorder %v104, 1056980736
  %vm107 = vcmp.gt.bf16.partialorder %v105, 1056980736
  %v108 = vsel %vm106, 65537, 0
  %v109 = vsel %vm107, 65537, 0
  %v110 = vunpack.c.l.b16 %v108
  %v111 = vunpack.c.l.b16 %v109
  %vm112 = vcmp.ne.s32.totalorder %v110, 0
  %vm113 = vcmp.ne.s32.totalorder %v111, 0
  %v114 = vsel %vm112, %v102, -1e+30
  %v115 = vsel %vm113, %v103, -1e+30
  %vm116 = vcmask 130048
  %v117 = vsel %vm116, %v114, -inf
  %118 = vmax.xlane.f32.xlu0 %v117
  %v119 = vpop.xlane.xlu0 %118
  %v120 = vsel %vm116, %v115, -inf
  %121 = vmax.xlane.f32.xlu0 %v120
  %v122 = vpop.xlane.xlu0 %121
  %v123 = vsub.f32 %v114, %v119
  %v124 = vsub.f32 %v115, %v122
  %v125 = vmul.f32 %v123, 1.442695
  %v126 = vpow.pop %v125
  %v127 = vmul.f32 %v124, 1.442695
  %v128 = vpow.pop %v127
  %v129 = vsel %vm116, %v126, 0.0
  %130 = vadd.xlane.f32.xlu0 %v129
  %v131 = vpop.xlane.xlu0 %130
  %v132 = vsel %vm116, %v128, 0.0
  %133 = vadd.xlane.f32.xlu0 %v132
  %v134 = vpop.xlane.xlu0 %133
  %v135 = vrcp.pop %v131
  %v136 = vrcp.pop %v134
  %v137 = vmul.f32 %v126, %v135
  %v138 = vmul.f32 %v128, %v136
  %v139 = vpack.c.bf16 %v138, %v137
  %v140 = vld [vmem:[%s3] sm:$0x1]
  %v142 = vlaneseq
  %v143 = vshrl.u32 %v142, 7
  %v144 = vsub.s32 0, %v143
  %v145 = vrot.slane %v140, %v144
  %v148 = vsel %vm116, %v139, 0
  %150 = vmatprep.subr.bf16.mxu0 0
  %151 = vmatpush1.bf16.msra.mxu0 %v40
  %152 = vmatprep.subr.bf16.mxu0 0
  %153 = vmatpush1.bf16.msra.mxu0 0
  %154 = vmatprep.subr.bf16.mxu0 0
  %155 = vmatpush1.bf16.msra.mxu0 0
  %156 = vmatprep.subr.bf16.mxu0 0
  %157 = vmatpush1.bf16.msra.mxu0 0
  %158 = vmatprep.subr.bf16.mxu0 0
  %159 = vmatpush1.bf16.msra.mxu0 0
  %160 = vmatprep.subr.bf16.mxu0 0
  %161 = vmatpush1.bf16.msra.mxu0 0
  %162 = vmatprep.subr.bf16.mxu0 0
  %163 = vmatpush1.bf16.msra.mxu0 0
  %164 = vmatprep.subr.bf16.mxu0 0
  %165 = vmatpush1.bf16.msra.mxu0 0
  %166 = vmatprep.subr.bf16.mxu0 0
  %167 = vmatpush1.bf16.msra.mxu0 0
  %168 = vmatprep.subr.bf16.mxu0 0
  %169 = vmatpush1.bf16.msra.mxu0 0
  %170 = vmatprep.subr.bf16.mxu0 0
  %171 = vmatpush1.bf16.msra.mxu0 0
  %172 = vmatprep.subr.bf16.mxu0 0
  %173 = vmatpush1.bf16.msra.mxu0 0
  %174 = vmatprep.subr.bf16.mxu0 0
  %175 = vmatpush1.bf16.msra.mxu0 0
  %176 = vmatprep.subr.bf16.mxu0 0
  %177 = vmatpush1.bf16.msra.mxu0 0
  %178 = vmatprep.subr.bf16.mxu0 0
  %179 = vmatpush1.bf16.msra.mxu0 0
  %180 = vmatprep.subr.bf16.mxu0 0
  %181 = vmatpush1.bf16.msra.mxu0 0
  %182 = vmatprep.mubr.bf16.mxu0 0
  %183 = vmatmul.mubr.bf16.gmra.mrb[0].mxu0 %v148
  %v184 = vpop.f32.mrb[0].mxu0
  %v185 = vadd.f32 %v145, %v184
  %v186 = vpop.f32.mrb[0].mxu0
  %v187 = vpop.f32.mrb[0].mxu0
  %v188 = vadd.f32 %v145, %v187
  %v189 = vpop.f32.mrb[0].mxu0
  %190 = vdwg.mxu0
  %v191 = vmax.f32 %v185, 0.0
  %v192 = vmax.f32 %v188, 0.0
  %v193 = vld [vmem:[%s4] sm:$0x1]
  %v195 = vlaneseq
  %v196 = vshrl.u32 %v195, 7
  %v197 = vsub.s32 0, %v196
  %v198 = vrot.slane %v193, %v197
  %v200 = vmul.f32 %v191, %v198
  %v201 = vmul.f32 %v192, %v198
  %202 = vadd.xlane.f32.xlu0 %v200
  %v203 = vpop.xlane.xlu0 %202
  %204 = vadd.xlane.f32.xlu0 %v201
  %v205 = vpop.xlane.xlu0 %204
  %v206 = vtanh.pop %v203
  %v207 = vtanh.pop %v205
  %v208 = vlaneseq
  %v209 = vand.u32 %v208, 127
  %vm210 = vcmp.lt.s32.totalorder %v209, 16
  %v211 = vsel %vm210, %v191, %v206
  %v212 = vsel %vm210, %v192, %v207
  %v213 = vpack.c.bf16 %v212, %v211
  %v215 = vunpack.c.l.b16 %v213
  %v216 = vunpack.c.h.b16 %v213
  %v217 = vpack.c.b16 %v215, %v215
  %v218 = vpack.c.b16 %v216, %v216
  %221 = vst [vmem:[%s5] sm:$0xf] %v217
  %222 = vst [vmem:[%s5 + $0x4] sm:$0xf] %v218
  // Predicated region
  $region22: #{gat_forward.6} parent=0 // pred_check
    _
  $region23: #{gat_forward.6} parent=0 // pred_check_branch
    %224 = sbr.rel (0) target = $region25
  $region24: #{gat_forward.6} parent=0 // pred_region
    _
  $region25: #{gat_forward.6} parent=0 // pred_fallthru
    _
  // Predicated region
  $region26: #{gat_forward.6} parent=0 // pred_check
    _
  $region27: #{gat_forward.6} parent=0 // pred_check_branch
    %226 = sbr.rel (0) target = $region29
  $region28: #{gat_forward.6} parent=0 // pred_region
    _
  $region29: #{gat_forward.6} parent=0 // pred_fallthru
    _

// kernel: gat_forward.8
$region0: #{gat_forward.8}
  #allocation0 [shape = 'u32[]', space=smem, size = 0x4, offset = 0x4, fixed_abs, tag = 'smem constant byte address 0x4 - core index']
  #allocation1 [shape = 'u32[144,128]{1,0:T(1,128)}', space=vmem, size = 0x12000, scoped, tag = 'internal scratch']
  %s0 = inlined_call_operand.vmem [shape: bf16[16,128], index: 0, kind: input, shape index: {}]
  %s1 = inlined_call_operand.vmem [shape: bf16[16,16], index: 1, kind: input, shape index: {}]
  %s2 = inlined_call_operand.vmem [shape: bf16[1,128], index: 2, kind: input, shape index: {}]
  %s3 = inlined_call_operand.vmem [shape: f32[1,128], index: 3, kind: input, shape index: {}]
  %s4 = inlined_call_operand.vmem [shape: f32[1,128], index: 4, kind: input, shape index: {}]
  %s5 = inlined_call_operand.vmem [shape: bf16[16,128], index: 5, kind: output, shape index: {}]
  %s6 = sld [smem:[#allocation0]]
  $region30: #{gat_forward.8} parent=0
    _
  %s8 = ssub.s32 1, %s6
  %s9 = scalar_select 0, %s8, %s6
  // Predicated region
  $region2: #{gat_forward.8} parent=0 // pred_check
    _
  $region3: #{gat_forward.8} parent=0 // pred_check_branch
    %11 = sbr.rel (0) target = $region5
  $region4: #{gat_forward.8} parent=0 // pred_region
    _
  $region5: #{gat_forward.8} parent=0 // pred_fallthru
    _
  // Predicated region
  $region6: #{gat_forward.8} parent=0 // pred_check
    _
  $region7: #{gat_forward.8} parent=0 // pred_check_branch
    %13 = sbr.rel (0) target = $region9
  $region8: #{gat_forward.8} parent=0 // pred_region
    _
  $region9: #{gat_forward.8} parent=0 // pred_fallthru
    _
  // Predicated region
  $region10: #{gat_forward.8} parent=0 // pred_check
    _
  $region11: #{gat_forward.8} parent=0 // pred_check_branch
    %15 = sbr.rel (0) target = $region13
  $region12: #{gat_forward.8} parent=0 // pred_region
    _
  $region13: #{gat_forward.8} parent=0 // pred_fallthru
    _
  // Predicated region
  $region14: #{gat_forward.8} parent=0 // pred_check
    _
  $region15: #{gat_forward.8} parent=0 // pred_check_branch
    %17 = sbr.rel (0) target = $region17
  $region16: #{gat_forward.8} parent=0 // pred_region
    _
  $region17: #{gat_forward.8} parent=0 // pred_fallthru
    _
  // Predicated region
  $region18: #{gat_forward.8} parent=0 // pred_check
    _
  $region19: #{gat_forward.8} parent=0 // pred_check_branch
    %19 = sbr.rel (0) target = $region21
  $region20: #{gat_forward.8} parent=0 // pred_region
    _
  $region21: #{gat_forward.8} parent=0 // pred_fallthru
    _
  %s24 = smul.u32 0, 16
  %v25 = vld [vmem:[%s0] sm:$0xf]
  %v26 = vld [vmem:[%s0 + $0x4] sm:$0xf]
  %s27 = sshra.s32 %s24, 3
  %s28 = sand.u32 %s24, 7
  %s29 = smul.addr %s27, 4
  %s30 = scalar_lea.vmem %s0, %s29
  %v31 = vld [vmem:[%s30] sm:$0xf]
  %v32 = vld [vmem:[%s30 + $0x4] sm:$0xf]
  %v33 = vunpack.c.l.bf16 %v31
  %v34 = vunpack.c.l.bf16 %v32
  %v35 = vld [vmem:[%s2] sm:$0x1]
  %v38 = vunpack.c.l.b16 %v25
  %v39 = vunpack.c.l.b16 %v26
  %v40 = vpack.c.b16 %v39, %v38
  %42 = vmatprep.subr.bf16.mxu0 0
  %43 = vmatpush1.bf16.xpose.msra.mxu0 %v40
  %44 = vmatprep.subr.bf16.mxu0 0
  %45 = vmatpush1.bf16.xpose.msra.mxu0 0
  %46 = vmatprep.subr.bf16.mxu0 0
  %47 = vmatpush1.bf16.xpose.msra.mxu0 0
  %48 = vmatprep.subr.bf16.mxu0 0
  %49 = vmatpush1.bf16.xpose.msra.mxu0 0
  %50 = vmatprep.subr.bf16.mxu0 0
  %51 = vmatpush1.bf16.xpose.msra.mxu0 0
  %52 = vmatprep.subr.bf16.mxu0 0
  %53 = vmatpush1.bf16.xpose.msra.mxu0 0
  %54 = vmatprep.subr.bf16.mxu0 0
  %55 = vmatpush1.bf16.xpose.msra.mxu0 0
  %56 = vmatprep.subr.bf16.mxu0 0
  %57 = vmatpush1.bf16.xpose.msra.mxu0 0
  %58 = vmatprep.subr.bf16.mxu0 0
  %59 = vmatpush1.bf16.xpose.msra.mxu0 0
  %60 = vmatprep.subr.bf16.mxu0 0
  %61 = vmatpush1.bf16.xpose.msra.mxu0 0
  %62 = vmatprep.subr.bf16.mxu0 0
  %63 = vmatpush1.bf16.xpose.msra.mxu0 0
  %64 = vmatprep.subr.bf16.mxu0 0
  %65 = vmatpush1.bf16.xpose.msra.mxu0 0
  %66 = vmatprep.subr.bf16.mxu0 0
  %67 = vmatpush1.bf16.xpose.msra.mxu0 0
  %68 = vmatprep.subr.bf16.mxu0 0
  %69 = vmatpush1.bf16.xpose.msra.mxu0 0
  %70 = vmatprep.subr.bf16.mxu0 0
  %71 = vmatpush1.bf16.xpose.msra.mxu0 0
  %72 = vmatprep.subr.bf16.mxu0 0
  %73 = vmatpush1.bf16.xpose.msra.mxu0 0
  %74 = vmatprep.mubr.bf16.mxu0 0
  %75 = vmatmul.mubr.bf16.gmra.mrb[0].mxu0 %v35
  %v76 = vpop.f32.mrb[0].mxu0
  %v77 = vadd.f32 0.0, %v76
  %v78 = vpop.f32.mrb[0].mxu0
  %v79 = vpop.f32.mrb[0].mxu0
  %v80 = vpop.f32.mrb[0].mxu0
  %81 = vdwg.mxu0
  %83 = vset.pattern.permute.xlu0 8
  %84 = vperm.xlu0 %83, %v33
  %v85 = vpop.permute.xlu0 %84
  %88 = vset.pattern.permute.xlu0 8
  %89 = vperm.xlu0 %88, %v34
  %v90 = vpop.permute.xlu0 %89
  %v92 = vlaneseq
  %v93 = vshrl.u32 %v92, 7
  %v94 = vsub.s32 0, %v93
  %v95 = vrot.slane %v77, %v94
  %v96 = vadd.f32 %v85, %v95
  %v97 = vadd.f32 %v90, %v95
  %vm98 = vcmp.ge.f32.partialorder %v96, 0.0
  %vm99 = vcmp.ge.f32.partialorder %v97, 0.0
  %v100 = vmul.f32 %v96, 0.2
  %v101 = vmul.f32 %v97, 0.2
  %v102 = vsel %vm98, %v96, %v100
  %v103 = vsel %vm99, %v97, %v101
  %v104 = vld [vmem:[%s1] sm:$0xf]
  %v105 = vld [vmem:[%s1 + $0x4] sm:$0xf]
  %vm106 = vcmp.gt.bf16.partialorder %v104, 1056980736
  %vm107 = vcmp.gt.bf16.partialorder %v105, 1056980736
  %v108 = vsel %vm106, 65537, 0
  %v109 = vsel %vm107, 65537, 0
  %v110 = vunpack.c.l.b16 %v108
  %v111 = vunpack.c.l.b16 %v109
  %vm112 = vcmp.ne.s32.totalorder %v110, 0
  %vm113 = vcmp.ne.s32.totalorder %v111, 0
  %v114 = vsel %vm112, %v102, -1e+30
  %v115 = vsel %vm113, %v103, -1e+30
  %vm116 = vcmask 130048
  %v117 = vsel %vm116, %v114, -inf
  %118 = vmax.xlane.f32.xlu0 %v117
  %v119 = vpop.xlane.xlu0 %118
  %v120 = vsel %vm116, %v115, -inf
  %121 = vmax.xlane.f32.xlu0 %v120
  %v122 = vpop.xlane.xlu0 %121
  %v123 = vsub.f32 %v114, %v119
  %v124 = vsub.f32 %v115, %v122
  %v125 = vmul.f32 %v123, 1.442695
  %v126 = vpow.pop %v125
  %v127 = vmul.f32 %v124, 1.442695
  %v128 = vpow.pop %v127
  %v129 = vsel %vm116, %v126, 0.0
  %130 = vadd.xlane.f32.xlu0 %v129
  %v131 = vpop.xlane.xlu0 %130
  %v132 = vsel %vm116, %v128, 0.0
  %133 = vadd.xlane.f32.xlu0 %v132
  %v134 = vpop.xlane.xlu0 %133
  %v135 = vrcp.pop %v131
  %v136 = vrcp.pop %v134
  %v137 = vmul.f32 %v126, %v135
  %v138 = vmul.f32 %v128, %v136
  %v139 = vpack.c.bf16 %v138, %v137
  %v140 = vld [vmem:[%s3] sm:$0x1]
  %v142 = vlaneseq
  %v143 = vshrl.u32 %v142, 7
  %v144 = vsub.s32 0, %v143
  %v145 = vrot.slane %v140, %v144
  %v148 = vsel %vm116, %v139, 0
  %150 = vmatprep.subr.bf16.mxu0 0
  %151 = vmatpush1.bf16.msra.mxu0 %v40
  %152 = vmatprep.subr.bf16.mxu0 0
  %153 = vmatpush1.bf16.msra.mxu0 0
  %154 = vmatprep.subr.bf16.mxu0 0
  %155 = vmatpush1.bf16.msra.mxu0 0
  %156 = vmatprep.subr.bf16.mxu0 0
  %157 = vmatpush1.bf16.msra.mxu0 0
  %158 = vmatprep.subr.bf16.mxu0 0
  %159 = vmatpush1.bf16.msra.mxu0 0
  %160 = vmatprep.subr.bf16.mxu0 0
  %161 = vmatpush1.bf16.msra.mxu0 0
  %162 = vmatprep.subr.bf16.mxu0 0
  %163 = vmatpush1.bf16.msra.mxu0 0
  %164 = vmatprep.subr.bf16.mxu0 0
  %165 = vmatpush1.bf16.msra.mxu0 0
  %166 = vmatprep.subr.bf16.mxu0 0
  %167 = vmatpush1.bf16.msra.mxu0 0
  %168 = vmatprep.subr.bf16.mxu0 0
  %169 = vmatpush1.bf16.msra.mxu0 0
  %170 = vmatprep.subr.bf16.mxu0 0
  %171 = vmatpush1.bf16.msra.mxu0 0
  %172 = vmatprep.subr.bf16.mxu0 0
  %173 = vmatpush1.bf16.msra.mxu0 0
  %174 = vmatprep.subr.bf16.mxu0 0
  %175 = vmatpush1.bf16.msra.mxu0 0
  %176 = vmatprep.subr.bf16.mxu0 0
  %177 = vmatpush1.bf16.msra.mxu0 0
  %178 = vmatprep.subr.bf16.mxu0 0
  %179 = vmatpush1.bf16.msra.mxu0 0
  %180 = vmatprep.subr.bf16.mxu0 0
  %181 = vmatpush1.bf16.msra.mxu0 0
  %182 = vmatprep.mubr.bf16.mxu0 0
  %183 = vmatmul.mubr.bf16.gmra.mrb[0].mxu0 %v148
  %v184 = vpop.f32.mrb[0].mxu0
  %v185 = vadd.f32 %v145, %v184
  %v186 = vpop.f32.mrb[0].mxu0
  %v187 = vpop.f32.mrb[0].mxu0
  %v188 = vadd.f32 %v145, %v187
  %v189 = vpop.f32.mrb[0].mxu0
  %190 = vdwg.mxu0
  %v191 = vmax.f32 %v185, 0.0
  %v192 = vmax.f32 %v188, 0.0
  %v193 = vld [vmem:[%s4] sm:$0x1]
  %v195 = vlaneseq
  %v196 = vshrl.u32 %v195, 7
  %v197 = vsub.s32 0, %v196
  %v198 = vrot.slane %v193, %v197
  %v200 = vmul.f32 %v191, %v198
  %v201 = vmul.f32 %v192, %v198
  %202 = vadd.xlane.f32.xlu0 %v200
  %v203 = vpop.xlane.xlu0 %202
  %204 = vadd.xlane.f32.xlu0 %v201
  %v205 = vpop.xlane.xlu0 %204
  %v206 = vtanh.pop %v203
  %v207 = vtanh.pop %v205
  %v208 = vlaneseq
  %v209 = vand.u32 %v208, 127
  %vm210 = vcmp.lt.s32.totalorder %v209, 8
  %v211 = vsel %vm210, %v191, %v206
  %v212 = vsel %vm210, %v192, %v207
  %v213 = vpack.c.bf16 %v212, %v211
  %v215 = vunpack.c.l.b16 %v213
  %v216 = vunpack.c.h.b16 %v213
  %v217 = vpack.c.b16 %v215, %v215
  %v218 = vpack.c.b16 %v216, %v216
  %221 = vst [vmem:[%s5] sm:$0xf] %v217
  %222 = vst [vmem:[%s5 + $0x4] sm:$0xf] %v218
  // Predicated region
  $region22: #{gat_forward.8} parent=0 // pred_check
    _
  $region23: #{gat_forward.8} parent=0 // pred_check_branch
    %224 = sbr.rel (0) target = $region25
  $region24: #{gat_forward.8} parent=0 // pred_region
    _
  $region25: #{gat_forward.8} parent=0 // pred_fallthru
    _
  // Predicated region
  $region26: #{gat_forward.8} parent=0 // pred_check
    _
  $region27: #{gat_forward.8} parent=0 // pred_check_branch
    %226 = sbr.rel (0) target = $region29
  $region28: #{gat_forward.8} parent=0 // pred_region
    _
  $region29: #{gat_forward.8} parent=0 // pred_fallthru
    _

// kernel: gat_forward.9
$region0: #{gat_forward.9}
  #allocation0 [shape = 'u32[]', space=smem, size = 0x4, offset = 0x4, fixed_abs, tag = 'smem constant byte address 0x4 - core index']
  #allocation1 [shape = 'u32[144,128]{1,0:T(1,128)}', space=vmem, size = 0x12000, scoped, tag = 'internal scratch']
  %s0 = inlined_call_operand.vmem [shape: f32[2,12], index: 0, kind: input, shape index: {}]
  %s1 = inlined_call_operand.vmem [shape: bf16[12,128], index: 1, kind: input, shape index: {}]
  %s2 = inlined_call_operand.vmem [shape: f32[128,128], index: 2, kind: input, shape index: {}]
  %s3 = inlined_call_operand.vmem [shape: f32[1,128], index: 3, kind: input, shape index: {}]
  %s4 = inlined_call_operand.hbm [shape: f32[2,128], index: 4, kind: output, shape index: {}]
  %s5 = sld [smem:[#allocation0]]
  $region26: #{gat_forward.9} parent=0
    _
  %s7 = ssub.s32 1, %s5
  %s8 = scalar_select 0, %s7, %s5
  $region1: #{gat_forward.9} parent=0
    #allocation2 [shape = 'u8[1024]{0}', space=vmem, size = 0x400, scoped, tag = 'output window, operand 0, single buffered']
    #allocation3 [shape = 's32[1]{0}', space=sflag, size = 0x4, scoped, tag = 'scoped memory for gat_forward.9']
    %9 = vsyncpa [#allocation3], 0
    // Predicated region
    $region2: #{gat_forward.9} parent=1 // pred_check
      _
    $region3: #{gat_forward.9} parent=1 // pred_check_branch
      %11 = sbr.rel (0) target = $region5
    $region4: #{gat_forward.9} parent=1 // pred_region
      _
    $region5: #{gat_forward.9} parent=1 // pred_fallthru
      _
    // Predicated region
    $region6: #{gat_forward.9} parent=1 // pred_check
      _
    $region7: #{gat_forward.9} parent=1 // pred_check_branch
      %13 = sbr.rel (0) target = $region9
    $region8: #{gat_forward.9} parent=1 // pred_region
      _
    $region9: #{gat_forward.9} parent=1 // pred_fallthru
      _
    // Predicated region
    $region10: #{gat_forward.9} parent=1 // pred_check
      _
    $region11: #{gat_forward.9} parent=1 // pred_check_branch
      %15 = sbr.rel (0) target = $region13
    $region12: #{gat_forward.9} parent=1 // pred_region
      _
    $region13: #{gat_forward.9} parent=1 // pred_fallthru
      _
    // Predicated region
    $region14: #{gat_forward.9} parent=1 // pred_check
      _
    $region15: #{gat_forward.9} parent=1 // pred_check_branch
      %17 = sbr.rel (0) target = $region17
    $region16: #{gat_forward.9} parent=1 // pred_region
      _
    $region17: #{gat_forward.9} parent=1 // pred_fallthru
      _
    %v18 = vld [vmem:[%s0] sm:$0x3]
    %v19 = vld [vmem:[%s1] sm:$0xf]
    %v20 = vld [vmem:[%s1 + $0x4] sm:$0x3]
    %v21 = vunpack.c.l.bf16 %v19
    %v22 = vunpack.c.l.bf16 %v20
    %vm23 = vcmask 97280
    %v25 = vsel %vm23, %v18, 0
    %vm27 = vcmask 1043456
    %v29 = vsel %vm27, %v22, 0
    %31 = vmatprep.subr.mxu0 0.0
    %32 = vmatpush1.msra.mxu0 %v21
    %33 = vmatprep.subr.mxu0 0.0
    %34 = vmatpush1.msra.mxu0 %v29
    %35 = vmatprep.subr.mxu0 0.0
    %36 = vmatpush1.msra.mxu0 0.0
    %37 = vmatprep.subr.mxu0 0.0
    %38 = vmatpush1.msra.mxu0 0.0
    %39 = vmatprep.subr.mxu0 0.0
    %40 = vmatpush1.msra.mxu0 0.0
    %41 = vmatprep.subr.mxu0 0.0
    %42 = vmatpush1.msra.mxu0 0.0
    %43 = vmatprep.subr.mxu0 0.0
    %44 = vmatpush1.msra.mxu0 0.0
    %45 = vmatprep.subr.mxu0 0.0
    %46 = vmatpush1.msra.mxu0 0.0
    %47 = vmatprep.subr.mxu0 0.0
    %48 = vmatpush1.msra.mxu0 0.0
    %49 = vmatprep.subr.mxu0 0.0
    %50 = vmatpush1.msra.mxu0 0.0
    %51 = vmatprep.subr.mxu0 0.0
    %52 = vmatpush1.msra.mxu0 0.0
    %53 = vmatprep.subr.mxu0 0.0
    %54 = vmatpush1.msra.mxu0 0.0
    %55 = vmatprep.subr.mxu0 0.0
    %56 = vmatpush1.msra.mxu0 0.0
    %57 = vmatprep.subr.mxu0 0.0
    %58 = vmatpush1.msra.mxu0 0.0
    %59 = vmatprep.subr.mxu0 0.0
    %60 = vmatpush1.msra.mxu0 0.0
    %61 = vmatprep.subr.mxu0 0.0
    %62 = vmatpush1.msra.mxu0 0.0
    %63 = vmatprep.subr.mxu0 0.0
    %64 = vmatpush1.msra.mxu0 0.0
    %65 = vmatprep.subr.mxu0 0.0
    %66 = vmatpush1.msra.mxu0 0.0
    %67 = vmatprep.subr.mxu0 0.0
    %68 = vmatpush1.msra.mxu0 0.0
    %69 = vmatprep.subr.mxu0 0.0
    %70 = vmatpush1.msra.mxu0 0.0
    %71 = vmatprep.subr.mxu0 0.0
    %72 = vmatpush1.msra.mxu0 0.0
    %73 = vmatprep.subr.mxu0 0.0
    %74 = vmatpush1.msra.mxu0 0.0
    %75 = vmatprep.subr.mxu0 0.0
    %76 = vmatpush1.msra.mxu0 0.0
    %77 = vmatprep.subr.mxu0 0.0
    %78 = vmatpush1.msra.mxu0 0.0
    %79 = vmatprep.subr.mxu0 0.0
    %80 = vmatpush1.msra.mxu0 0.0
    %81 = vmatprep.subr.mxu0 0.0
    %82 = vmatpush1.msra.mxu0 0.0
    %83 = vmatprep.subr.mxu0 0.0
    %84 = vmatpush1.msra.mxu0 0.0
    %85 = vmatprep.subr.mxu0 0.0
    %86 = vmatpush1.msra.mxu0 0.0
    %87 = vmatprep.subr.mxu0 0.0
    %88 = vmatpush1.msra.mxu0 0.0
    %89 = vmatprep.subr.mxu0 0.0
    %90 = vmatpush1.msra.mxu0 0.0
    %91 = vmatprep.subr.mxu0 0.0
    %92 = vmatpush1.msra.mxu0 0.0
    %93 = vmatprep.subr.mxu0 0.0
    %94 = vmatpush1.msra.mxu0 0.0
    %95 = vmatprep.mubr.f32.mxu0 0.0
    %96 = vmatmul.mubr.f32.gmra.mrb[0].mxu0 %v25
    %v97 = vpop.f32.mrb[0].mxu0
    %v98 = vadd.f32 0.0, %v97
    %v99 = vpop.f32.mrb[0].mxu0
    %100 = vdwg.mxu0
    %v101 = vld [vmem:[%s2] sm:$0xff]
    %v102 = vld [vmem:[%s2 + $0x8] sm:$0xff]
    %v103 = vld [vmem:[%s2 + $0x10] sm:$0xff]
    %v104 = vld [vmem:[%s2 + $0x18] sm:$0xff]
    %v105 = vld [vmem:[%s2 + $0x20] sm:$0xff]
    %v106 = vld [vmem:[%s2 + $0x28] sm:$0xff]
    %v107 = vld [vmem:[%s2 + $0x30] sm:$0xff]
    %v108 = vld [vmem:[%s2 + $0x38] sm:$0xff]
    %v109 = vld [vmem:[%s2 + $0x40] sm:$0xff]
    %v110 = vld [vmem:[%s2 + $0x48] sm:$0xff]
    %v111 = vld [vmem:[%s2 + $0x50] sm:$0xff]
    %v112 = vld [vmem:[%s2 + $0x58] sm:$0xff]
    %v113 = vld [vmem:[%s2 + $0x60] sm:$0xff]
    %v114 = vld [vmem:[%s2 + $0x68] sm:$0xff]
    %v115 = vld [vmem:[%s2 + $0x70] sm:$0xff]
    %v116 = vld [vmem:[%s2 + $0x78] sm:$0xff]
    %v117 = vld [vmem:[%s3] sm:$0x1]
    %v119 = vlaneseq
    %v120 = vshrl.u32 %v119, 7
    %v121 = vsub.s32 0, %v120
    %v122 = vrot.slane %v117, %v121
    %124 = vmatprep.subr.mxu0 0.0
    %125 = vmatpush1.msra.mxu0 %v101
    %126 = vmatprep.subr.mxu0 0.0
    %127 = vmatpush1.msra.mxu0 %v102
    %128 = vmatprep.subr.mxu0 0.0
    %129 = vmatpush1.msra.mxu0 %v103
    %130 = vmatprep.subr.mxu0 0.0
    %131 = vmatpush1.msra.mxu0 %v104
    %132 = vmatprep.subr.mxu0 0.0
    %133 = vmatpush1.msra.mxu0 %v105
    %134 = vmatprep.subr.mxu0 0.0
    %135 = vmatpush1.msra.mxu0 %v106
    %136 = vmatprep.subr.mxu0 0.0
    %137 = vmatpush1.msra.mxu0 %v107
    %138 = vmatprep.subr.mxu0 0.0
    %139 = vmatpush1.msra.mxu0 %v108
    %140 = vmatprep.subr.mxu0 0.0
    %141 = vmatpush1.msra.mxu0 %v109
    %142 = vmatprep.subr.mxu0 0.0
    %143 = vmatpush1.msra.mxu0 %v110
    %144 = vmatprep.subr.mxu0 0.0
    %145 = vmatpush1.msra.mxu0 %v111
    %146 = vmatprep.subr.mxu0 0.0
    %147 = vmatpush1.msra.mxu0 %v112
    %148 = vmatprep.subr.mxu0 0.0
    %149 = vmatpush1.msra.mxu0 %v113
    %150 = vmatprep.subr.mxu0 0.0
    %151 = vmatpush1.msra.mxu0 %v114
    %152 = vmatprep.subr.mxu0 0.0
    %153 = vmatpush1.msra.mxu0 %v115
    %154 = vmatprep.subr.mxu0 0.0
    %155 = vmatpush1.msra.mxu0 %v116
    %156 = vmatprep.subr.mxu0 0.0
    %157 = vmatpush1.msra.mxu0 0.0
    %158 = vmatprep.subr.mxu0 0.0
    %159 = vmatpush1.msra.mxu0 0.0
    %160 = vmatprep.subr.mxu0 0.0
    %161 = vmatpush1.msra.mxu0 0.0
    %162 = vmatprep.subr.mxu0 0.0
    %163 = vmatpush1.msra.mxu0 0.0
    %164 = vmatprep.subr.mxu0 0.0
    %165 = vmatpush1.msra.mxu0 0.0
    %166 = vmatprep.subr.mxu0 0.0
    %167 = vmatpush1.msra.mxu0 0.0
    %168 = vmatprep.subr.mxu0 0.0
    %169 = vmatpush1.msra.mxu0 0.0
    %170 = vmatprep.subr.mxu0 0.0
    %171 = vmatpush1.msra.mxu0 0.0
    %172 = vmatprep.subr.mxu0 0.0
    %173 = vmatpush1.msra.mxu0 0.0
    %174 = vmatprep.subr.mxu0 0.0
    %175 = vmatpush1.msra.mxu0 0.0
    %176 = vmatprep.subr.mxu0 0.0
    %177 = vmatpush1.msra.mxu0 0.0
    %178 = vmatprep.subr.mxu0 0.0
    %179 = vmatpush1.msra.mxu0 0.0
    %180 = vmatprep.subr.mxu0 0.0
    %181 = vmatpush1.msra.mxu0 0.0
    %182 = vmatprep.subr.mxu0 0.0
    %183 = vmatpush1.msra.mxu0 0.0
    %184 = vmatprep.subr.mxu0 0.0
    %185 = vmatpush1.msra.mxu0 0.0
    %186 = vmatprep.subr.mxu0 0.0
    %187 = vmatpush1.msra.mxu0 0.0
    %188 = vmatprep.mubr.f32.mxu0 0.0
    %189 = vmatmul.mubr.f32.gmra.mrb[0].mxu0 %v98
    %v190 = vpop.f32.mrb[0].mxu0
    %v191 = vadd.f32 %v122, %v190
    %v192 = vpop.f32.mrb[0].mxu0
    %193 = vdwg.mxu0
    %v194 = vlaneseq
    %v195 = vand.u32 %v194, 127
    %vm196 = vcmp.lt.s32.totalorder %v195, 3
    %v197 = vsel %vm196, %v191, -1e+30
    %vm198 = vcmask 1041408
    %v199 = vsel %vm198, %v197, -inf
    %200 = vmax.xlane.f32.xlu0 %v199
    %v201 = vpop.xlane.xlu0 %200
    %v202 = vsub.f32 %v197, %v201
    %v203 = vmul.f32 %v202, 1.442695
    %v204 = vpow.pop %v203
    %v205 = vsel %vm198, %v204, 0.0
    %206 = vadd.xlane.f32.xlu0 %v205
    %v207 = vpop.xlane.xlu0 %206
    %v208 = vlog2.pop %v207
    %v209 = vmul.f32 %v208, 0.6931472
    %v210 = vadd.f32 %v201, %v209
    %v211 = vsub.f32 %v191, %v210
    %v212 = vsel %vm196, %v211, 0.0
    %213 = vst [vmem:[#allocation2] sm:$0x3] %v212
    // Predicated region
    $region18: #{gat_forward.9} parent=1 // pred_check
      _
    $region19: #{gat_forward.9} parent=1 // pred_check_branch
      %215 = sbr.rel (0) target = $region21
    $region20: #{gat_forward.9} parent=1 // pred_region
      %s217 = ssub.s32 32, 32
      %218 = vsyncadd [#allocation3], %s217
      %s220 = sshll.u32 [#allocation2], 4
      %s221 = int_to_ptr.vmem [resolvable:$true] %s220
      %223 = dma.vmem_to_hbm [thread:$0]  %s221, 32, %s4, [#allocation3]
    $region21: #{gat_forward.9} parent=1 // pred_fallthru
      _
    // Predicated region
    $region22: #{gat_forward.9} parent=1 // pred_check
      _
    $region23: #{gat_forward.9} parent=1 // pred_check_branch
      %225 = sbr.rel (0) target = $region25
    $region24: #{gat_forward.9} parent=1 // pred_region
      %226 = dma.done [#allocation3], 32
    $region25: #{gat_forward.9} parent=1 // pred_fallthru
      _
    %227 = vsyncpa [#allocation3], 1

</llo_original>
